<compile_context>
chip_gen: v6e
topology: v6e:2x2x1
jax: 0.10.0
libtpu: 0.0.40
codegen_flags: <defaults>
</compile_context>

<pallas_src>
import jax
import jax.numpy as jnp
from jax.experimental import pallas as pl
from jax.experimental.pallas import tpu as pltpu

C1 = 0.01 ** 2
C2 = 0.03 ** 2


def _ssim_kernel(x_ref, y_ref, o_ref):
    B, H, W = o_ref.shape

    # Compute in f32 regardless of input dtype.
    x = x_ref[...].astype(jnp.float32)
    y = y_ref[...].astype(jnp.float32)

    # Roll path only when the block is in native (8, 128) layout; otherwise a
    # roll would be a masked relayout and slice+concat is just as good.
    aligned = (H % 8 == 0) and (W % 128 == 0)
    if aligned:
        # Masks built once and reused by all five pools (no in-loop rebuilds).
        ri = jax.lax.broadcasted_iota(jnp.int32, (1, H, W), 1)
        ci = jax.lax.broadcasted_iota(jnp.int32, (1, H, W), 2)
        first_row, last_row = ri == 0, ri == H - 1
        first_col, last_col = ci == 0, ci == W - 1

    def reflect_sum3(a, axis):
        """3-tap sum along `axis` with 1-pixel reflection at the borders."""
        size = a.shape[axis]
        if aligned:
            # Interior: circular roll (XLU) — direction-agnostic since we sum
            # both +1 and -1 shifts.  Borders: overwritten with the exact
            # reflection identity computed from direct slices of `a`.
            circ = (a
                    + pltpu.roll(a, 1, axis)
                    + pltpu.roll(a, size - 1, axis))
            if axis == 1:
                first_fix = a[:, 0:1, :] + 2.0 * a[:, 1:2, :]
                last_fix = a[:, size - 1:size, :] + 2.0 * a[:, size - 2:size - 1, :]
                out = jnp.where(first_row, first_fix, circ)
                return jnp.where(last_row, last_fix, out)
            else:
                first_fix = a[:, :, 0:1] + 2.0 * a[:, :, 1:2]
                last_fix = a[:, :, size - 1:size] + 2.0 * a[:, :, size - 2:size - 1]
                out = jnp.where(first_col, first_fix, circ)
                return jnp.where(last_col, last_fix, out)
        # Unaligned fallback: build the reflected neighbours with static
        # slices + concatenate (reflection baked in, no fix-up pass, no padded
        # slab, no offset-2 reads).
        if axis == 1:
            prev = jnp.concatenate([a[:, 1:2, :], a[:, :size - 1, :]], axis=1)
            nxt = jnp.concatenate([a[:, 1:, :], a[:, size - 2:size - 1, :]], axis=1)
        else:
            prev = jnp.concatenate([a[:, :, 1:2], a[:, :, :size - 1]], axis=2)
            nxt = jnp.concatenate([a[:, :, 1:], a[:, :, size - 2:size - 1]], axis=2)
        return a + prev + nxt

    def pool_sum(a):
        # Separable 3x3 *sum* (not mean) with reflection padding semantics.
        return reflect_sum3(reflect_sum3(a, 1), 2)

    sx = pool_sum(x)
    sy = pool_sum(y)
    sxx = pool_sum(x * x)
    syy = pool_sum(y * y)
    sxy = pool_sum(x * y)

    # Folded normalisation: with S = 9*mu etc.,
    #   81^2 * ssim_n = (2*Sx*Sy + 81*C1) * (2*(9*Sxy - Sx*Sy) + 81*C2)
    #   81^2 * ssim_d = (Sx^2 + Sy^2 + 81*C1) * (9*(Sxx+Syy) - Sx^2 - Sy^2 + 81*C2)
    # and the 81^2 cancels in the ratio — saves five full-size multiplies.
    c1 = 81.0 * C1
    c2 = 81.0 * C2
    sxsy = sx * sy
    sx2 = sx * sx
    sy2 = sy * sy
    num = (2.0 * sxsy + c1) * (2.0 * (9.0 * sxy - sxsy) + c2)
    den = (sx2 + sy2 + c1) * (9.0 * (sxx + syy) - sx2 - sy2 + c2)

    # Exact divide: approx EUP reciprocal fails the 1e-5 reference tolerance.
    out = jnp.clip((1.0 - num / den) * 0.5, 0.0, 1.0)
    o_ref[...] = out.astype(o_ref.dtype)


def _round_up(v, m):
    return (v + m - 1) // m * m


# Concurrently-live f32 (B, H, W) buffers per grid step: 2 double-buffered
# inputs + 1 double-buffered output (pipeline) + in-kernel intermediates
# (products, shifted neighbours, the five pooled sums, formula temps).
_LIVE_BUFFERS = 22


def _vmem_params():
    """(working-set budget, vmem_limit_bytes) derived from the device."""
    cap = 128 * 1024 * 1024  # conservative default (v5e/v6e physical VMEM)
    try:
        info = pltpu.get_tpu_info()
        cap = int(getattr(info, "vmem_capacity_bytes", cap)) or cap
    except Exception:
        pass
    budget = (cap * 5) // 8                        # ~80 MiB on 128, ~40 MiB on 64
    limit = min(cap - (8 << 20), budget + (24 << 20))
    limit = max(limit, min(cap, 32 << 20))
    return budget, limit


def _choose_batch(n_imgs, H, W, budget_bytes):
    """Largest divisor B of n_imgs whose per-step working set fits the budget,
    preferring an even number of grid steps (>= 2) so 2-TensorCore parts
    (v7x) keep both cores busy."""
    per_img = _LIVE_BUFFERS * _round_up(H, 8) * _round_up(W, 128) * 4
    fits = [b for b in range(1, n_imgs + 1)
            if n_imgs % b == 0 and b * per_img <= budget_bytes]
    if not fits:
        # TODO(synk): H-tiled halo path instead of hoping B=1 still compiles.
        return 1
    steps = lambda b: n_imgs // b
    even_multi = [b for b in fits if steps(b) >= 2 and steps(b) % 2 == 0]
    multi = [b for b in fits if steps(b) >= 2]
    if even_multi:
        return max(even_multi)
    if multi:
        return max(multi)
    return max(fits)


def ssim(x, y):
    """x, y: (N, C, H, W) -> (N, C, H, W) SSIM loss map (Monodepth-style)."""
    N, C, H, W = x.shape
    if H < 2 or W < 2:
        raise ValueError("ReflectionPad2d(1) requires H >= 2 and W >= 2")
    n_imgs = N * C
    x3 = x.reshape(n_imgs, H, W)      # free reshape, no data movement
    y3 = y.reshape(n_imgs, H, W)

    budget, vmem_limit = _vmem_params()
    B = _choose_batch(n_imgs, H, W, budget)
    grid = (n_imgs // B,)

    out = pl.pallas_call(
        _ssim_kernel,
        out_shape=jax.ShapeDtypeStruct((n_imgs, H, W), x.dtype),
        grid=grid,
        in_specs=[
            pl.BlockSpec((B, H, W), lambda i: (i, 0, 0)),
            pl.BlockSpec((B, H, W), lambda i: (i, 0, 0)),
        ],
        out_specs=pl.BlockSpec((B, H, W), lambda i: (i, 0, 0)),
        compiler_params=pltpu.CompilerParams(
            dimension_semantics=("parallel",),
            vmem_limit_bytes=vmem_limit,
        ),
    )(x3, y3)
    return out.reshape(N, C, H, W)


def _ssim_ref(x, y):
    # Pure-JAX reference mirroring the PyTorch module (for the sanity check).
    pad = ((0, 0), (0, 0), (1, 1), (1, 1))
    xp = jnp.pad(x, pad, mode="reflect")
    yp = jnp.pad(y, pad, mode="reflect")

    def pool(a):
        return jax.lax.reduce_window(
            a, 0.0, jax.lax.add, (1, 1, 3, 3), (1, 1, 1, 1), "VALID"
        ) / 9.0

    mu_x, mu_y = pool(xp), pool(yp)
    sigma_x = pool(xp * xp) - mu_x ** 2
    sigma_y = pool(yp * yp) - mu_y ** 2
    sigma_xy = pool(xp * yp) - mu_x * mu_y
    n = (2 * mu_x * mu_y + C1) * (2 * sigma_xy + C2)
    d = (mu_x ** 2 + mu_y ** 2 + C1) * (sigma_x + sigma_y + C2)
    return jnp.clip((1 - n / d) / 2, 0.0, 1.0)


if __name__ == "__main__":
    key = jax.random.PRNGKey(0)
    kx, ky = jax.random.split(key)
    N, C, H, W = 2, 4, 16, 16
    x = jax.random.uniform(kx, (N, C, H, W), dtype=jnp.float32)
    y = jax.random.uniform(ky, (N, C, H, W), dtype=jnp.float32)

    out = jax.block_until_ready(ssim(x, y))
    ref = jax.block_until_ready(_ssim_ref(x, y))

    assert out.shape == (N, C, H, W)
    err = float(jnp.max(jnp.abs(out - ref)))
    assert err < 1e-5, err
    print("KERNEL_OK")
</pallas_src>

<mosaic_0001>
module attributes {stable_mosaic.version = 11 : i64} {
  func.func @_ssim_kernel(%arg0: i32, %arg1: memref<4x16x16xf32, #tpu.memory_space<vmem>>, %arg2: memref<4x16x16xf32, #tpu.memory_space<vmem>>, %arg3: memref<4x16x16xf32, #tpu.memory_space<vmem>>) attributes {dimension_semantics = [#tpu.dimension_semantics<parallel>], iteration_bounds = array<i64: 2>, scalar_prefetch = 0 : i64, scratch_operands = 0 : i64, tpu.core_type = #tpu.core_type<tc>, window_params = [{transform_indices = @transform_0, window_bounds = array<i64: 4, 16, 16>}, {transform_indices = @transform_1, window_bounds = array<i64: 4, 16, 16>}, {transform_indices = @transform_2, window_bounds = array<i64: 4, 16, 16>}]} {
    %c0 = arith.constant 0 : index
    %c0_0 = arith.constant 0 : index
    %c0_1 = arith.constant 0 : index
    %0 = vector.load %arg1[%c0, %c0_0, %c0_1] : memref<4x16x16xf32, #tpu.memory_space<vmem>>, vector<4x16x16xf32>
    %c0_2 = arith.constant 0 : index
    %c0_3 = arith.constant 0 : index
    %c0_4 = arith.constant 0 : index
    %1 = vector.load %arg2[%c0_2, %c0_3, %c0_4] : memref<4x16x16xf32, #tpu.memory_space<vmem>>, vector<4x16x16xf32>
    %2 = vector.extract_strided_slice %0 {offsets = [0, 1, 0], sizes = [4, 1, 16], strides = [1, 1, 1]} : vector<4x16x16xf32> to vector<4x1x16xf32>
    %3 = vector.extract_strided_slice %0 {offsets = [0, 0, 0], sizes = [4, 15, 16], strides = [1, 1, 1]} : vector<4x16x16xf32> to vector<4x15x16xf32>
    %4 = tpu.concatenate %2, %3 in 1 : vector<4x1x16xf32>, vector<4x15x16xf32> -> vector<4x16x16xf32>
    %5 = vector.extract_strided_slice %0 {offsets = [0, 1, 0], sizes = [4, 15, 16], strides = [1, 1, 1]} : vector<4x16x16xf32> to vector<4x15x16xf32>
    %6 = vector.extract_strided_slice %0 {offsets = [0, 14, 0], sizes = [4, 1, 16], strides = [1, 1, 1]} : vector<4x16x16xf32> to vector<4x1x16xf32>
    %7 = tpu.concatenate %5, %6 in 1 : vector<4x15x16xf32>, vector<4x1x16xf32> -> vector<4x16x16xf32>
    %8 = arith.addf %0, %4 : vector<4x16x16xf32>
    %9 = arith.addf %8, %7 : vector<4x16x16xf32>
    %10 = vector.extract_strided_slice %9 {offsets = [0, 0, 1], sizes = [4, 16, 1], strides = [1, 1, 1]} : vector<4x16x16xf32> to vector<4x16x1xf32>
    %11 = vector.extract_strided_slice %9 {offsets = [0, 0, 0], sizes = [4, 16, 15], strides = [1, 1, 1]} : vector<4x16x16xf32> to vector<4x16x15xf32>
    %12 = tpu.concatenate %10, %11 in 2 : vector<4x16x1xf32>, vector<4x16x15xf32> -> vector<4x16x16xf32>
    %13 = vector.extract_strided_slice %9 {offsets = [0, 0, 1], sizes = [4, 16, 15], strides = [1, 1, 1]} : vector<4x16x16xf32> to vector<4x16x15xf32>
    %14 = vector.extract_strided_slice %9 {offsets = [0, 0, 14], sizes = [4, 16, 1], strides = [1, 1, 1]} : vector<4x16x16xf32> to vector<4x16x1xf32>
    %15 = tpu.concatenate %13, %14 in 2 : vector<4x16x15xf32>, vector<4x16x1xf32> -> vector<4x16x16xf32>
    %16 = arith.addf %9, %12 : vector<4x16x16xf32>
    %17 = arith.addf %16, %15 : vector<4x16x16xf32>
    %18 = vector.extract_strided_slice %1 {offsets = [0, 1, 0], sizes = [4, 1, 16], strides = [1, 1, 1]} : vector<4x16x16xf32> to vector<4x1x16xf32>
    %19 = vector.extract_strided_slice %1 {offsets = [0, 0, 0], sizes = [4, 15, 16], strides = [1, 1, 1]} : vector<4x16x16xf32> to vector<4x15x16xf32>
    %20 = tpu.concatenate %18, %19 in 1 : vector<4x1x16xf32>, vector<4x15x16xf32> -> vector<4x16x16xf32>
    %21 = vector.extract_strided_slice %1 {offsets = [0, 1, 0], sizes = [4, 15, 16], strides = [1, 1, 1]} : vector<4x16x16xf32> to vector<4x15x16xf32>
    %22 = vector.extract_strided_slice %1 {offsets = [0, 14, 0], sizes = [4, 1, 16], strides = [1, 1, 1]} : vector<4x16x16xf32> to vector<4x1x16xf32>
    %23 = tpu.concatenate %21, %22 in 1 : vector<4x15x16xf32>, vector<4x1x16xf32> -> vector<4x16x16xf32>
    %24 = arith.addf %1, %20 : vector<4x16x16xf32>
    %25 = arith.addf %24, %23 : vector<4x16x16xf32>
    %26 = vector.extract_strided_slice %25 {offsets = [0, 0, 1], sizes = [4, 16, 1], strides = [1, 1, 1]} : vector<4x16x16xf32> to vector<4x16x1xf32>
    %27 = vector.extract_strided_slice %25 {offsets = [0, 0, 0], sizes = [4, 16, 15], strides = [1, 1, 1]} : vector<4x16x16xf32> to vector<4x16x15xf32>
    %28 = tpu.concatenate %26, %27 in 2 : vector<4x16x1xf32>, vector<4x16x15xf32> -> vector<4x16x16xf32>
    %29 = vector.extract_strided_slice %25 {offsets = [0, 0, 1], sizes = [4, 16, 15], strides = [1, 1, 1]} : vector<4x16x16xf32> to vector<4x16x15xf32>
    %30 = vector.extract_strided_slice %25 {offsets = [0, 0, 14], sizes = [4, 16, 1], strides = [1, 1, 1]} : vector<4x16x16xf32> to vector<4x16x1xf32>
    %31 = tpu.concatenate %29, %30 in 2 : vector<4x16x15xf32>, vector<4x16x1xf32> -> vector<4x16x16xf32>
    %32 = arith.addf %25, %28 : vector<4x16x16xf32>
    %33 = arith.addf %32, %31 : vector<4x16x16xf32>
    %34 = arith.mulf %0, %0 : vector<4x16x16xf32>
    %35 = vector.extract_strided_slice %34 {offsets = [0, 1, 0], sizes = [4, 1, 16], strides = [1, 1, 1]} : vector<4x16x16xf32> to vector<4x1x16xf32>
    %36 = vector.extract_strided_slice %34 {offsets = [0, 0, 0], sizes = [4, 15, 16], strides = [1, 1, 1]} : vector<4x16x16xf32> to vector<4x15x16xf32>
    %37 = tpu.concatenate %35, %36 in 1 : vector<4x1x16xf32>, vector<4x15x16xf32> -> vector<4x16x16xf32>
    %38 = vector.extract_strided_slice %34 {offsets = [0, 1, 0], sizes = [4, 15, 16], strides = [1, 1, 1]} : vector<4x16x16xf32> to vector<4x15x16xf32>
    %39 = vector.extract_strided_slice %34 {offsets = [0, 14, 0], sizes = [4, 1, 16], strides = [1, 1, 1]} : vector<4x16x16xf32> to vector<4x1x16xf32>
    %40 = tpu.concatenate %38, %39 in 1 : vector<4x15x16xf32>, vector<4x1x16xf32> -> vector<4x16x16xf32>
    %41 = arith.addf %34, %37 : vector<4x16x16xf32>
    %42 = arith.addf %41, %40 : vector<4x16x16xf32>
    %43 = vector.extract_strided_slice %42 {offsets = [0, 0, 1], sizes = [4, 16, 1], strides = [1, 1, 1]} : vector<4x16x16xf32> to vector<4x16x1xf32>
    %44 = vector.extract_strided_slice %42 {offsets = [0, 0, 0], sizes = [4, 16, 15], strides = [1, 1, 1]} : vector<4x16x16xf32> to vector<4x16x15xf32>
    %45 = tpu.concatenate %43, %44 in 2 : vector<4x16x1xf32>, vector<4x16x15xf32> -> vector<4x16x16xf32>
    %46 = vector.extract_strided_slice %42 {offsets = [0, 0, 1], sizes = [4, 16, 15], strides = [1, 1, 1]} : vector<4x16x16xf32> to vector<4x16x15xf32>
    %47 = vector.extract_strided_slice %42 {offsets = [0, 0, 14], sizes = [4, 16, 1], strides = [1, 1, 1]} : vector<4x16x16xf32> to vector<4x16x1xf32>
    %48 = tpu.concatenate %46, %47 in 2 : vector<4x16x15xf32>, vector<4x16x1xf32> -> vector<4x16x16xf32>
    %49 = arith.addf %42, %45 : vector<4x16x16xf32>
    %50 = arith.addf %49, %48 : vector<4x16x16xf32>
    %51 = arith.mulf %1, %1 : vector<4x16x16xf32>
    %52 = vector.extract_strided_slice %51 {offsets = [0, 1, 0], sizes = [4, 1, 16], strides = [1, 1, 1]} : vector<4x16x16xf32> to vector<4x1x16xf32>
    %53 = vector.extract_strided_slice %51 {offsets = [0, 0, 0], sizes = [4, 15, 16], strides = [1, 1, 1]} : vector<4x16x16xf32> to vector<4x15x16xf32>
    %54 = tpu.concatenate %52, %53 in 1 : vector<4x1x16xf32>, vector<4x15x16xf32> -> vector<4x16x16xf32>
    %55 = vector.extract_strided_slice %51 {offsets = [0, 1, 0], sizes = [4, 15, 16], strides = [1, 1, 1]} : vector<4x16x16xf32> to vector<4x15x16xf32>
    %56 = vector.extract_strided_slice %51 {offsets = [0, 14, 0], sizes = [4, 1, 16], strides = [1, 1, 1]} : vector<4x16x16xf32> to vector<4x1x16xf32>
    %57 = tpu.concatenate %55, %56 in 1 : vector<4x15x16xf32>, vector<4x1x16xf32> -> vector<4x16x16xf32>
    %58 = arith.addf %51, %54 : vector<4x16x16xf32>
    %59 = arith.addf %58, %57 : vector<4x16x16xf32>
    %60 = vector.extract_strided_slice %59 {offsets = [0, 0, 1], sizes = [4, 16, 1], strides = [1, 1, 1]} : vector<4x16x16xf32> to vector<4x16x1xf32>
    %61 = vector.extract_strided_slice %59 {offsets = [0, 0, 0], sizes = [4, 16, 15], strides = [1, 1, 1]} : vector<4x16x16xf32> to vector<4x16x15xf32>
    %62 = tpu.concatenate %60, %61 in 2 : vector<4x16x1xf32>, vector<4x16x15xf32> -> vector<4x16x16xf32>
    %63 = vector.extract_strided_slice %59 {offsets = [0, 0, 1], sizes = [4, 16, 15], strides = [1, 1, 1]} : vector<4x16x16xf32> to vector<4x16x15xf32>
    %64 = vector.extract_strided_slice %59 {offsets = [0, 0, 14], sizes = [4, 16, 1], strides = [1, 1, 1]} : vector<4x16x16xf32> to vector<4x16x1xf32>
    %65 = tpu.concatenate %63, %64 in 2 : vector<4x16x15xf32>, vector<4x16x1xf32> -> vector<4x16x16xf32>
    %66 = arith.addf %59, %62 : vector<4x16x16xf32>
    %67 = arith.addf %66, %65 : vector<4x16x16xf32>
    %68 = arith.mulf %0, %1 : vector<4x16x16xf32>
    %69 = vector.extract_strided_slice %68 {offsets = [0, 1, 0], sizes = [4, 1, 16], strides = [1, 1, 1]} : vector<4x16x16xf32> to vector<4x1x16xf32>
    %70 = vector.extract_strided_slice %68 {offsets = [0, 0, 0], sizes = [4, 15, 16], strides = [1, 1, 1]} : vector<4x16x16xf32> to vector<4x15x16xf32>
    %71 = tpu.concatenate %69, %70 in 1 : vector<4x1x16xf32>, vector<4x15x16xf32> -> vector<4x16x16xf32>
    %72 = vector.extract_strided_slice %68 {offsets = [0, 1, 0], sizes = [4, 15, 16], strides = [1, 1, 1]} : vector<4x16x16xf32> to vector<4x15x16xf32>
    %73 = vector.extract_strided_slice %68 {offsets = [0, 14, 0], sizes = [4, 1, 16], strides = [1, 1, 1]} : vector<4x16x16xf32> to vector<4x1x16xf32>
    %74 = tpu.concatenate %72, %73 in 1 : vector<4x15x16xf32>, vector<4x1x16xf32> -> vector<4x16x16xf32>
    %75 = arith.addf %68, %71 : vector<4x16x16xf32>
    %76 = arith.addf %75, %74 : vector<4x16x16xf32>
    %77 = vector.extract_strided_slice %76 {offsets = [0, 0, 1], sizes = [4, 16, 1], strides = [1, 1, 1]} : vector<4x16x16xf32> to vector<4x16x1xf32>
    %78 = vector.extract_strided_slice %76 {offsets = [0, 0, 0], sizes = [4, 16, 15], strides = [1, 1, 1]} : vector<4x16x16xf32> to vector<4x16x15xf32>
    %79 = tpu.concatenate %77, %78 in 2 : vector<4x16x1xf32>, vector<4x16x15xf32> -> vector<4x16x16xf32>
    %80 = vector.extract_strided_slice %76 {offsets = [0, 0, 1], sizes = [4, 16, 15], strides = [1, 1, 1]} : vector<4x16x16xf32> to vector<4x16x15xf32>
    %81 = vector.extract_strided_slice %76 {offsets = [0, 0, 14], sizes = [4, 16, 1], strides = [1, 1, 1]} : vector<4x16x16xf32> to vector<4x16x1xf32>
    %82 = tpu.concatenate %80, %81 in 2 : vector<4x16x15xf32>, vector<4x16x1xf32> -> vector<4x16x16xf32>
    %83 = arith.addf %76, %79 : vector<4x16x16xf32>
    %84 = arith.addf %83, %82 : vector<4x16x16xf32>
    %85 = arith.mulf %17, %33 : vector<4x16x16xf32>
    %86 = arith.mulf %17, %17 : vector<4x16x16xf32>
    %87 = arith.mulf %33, %33 : vector<4x16x16xf32>
    %cst = arith.constant 2.000000e+00 : f32
    %88 = vector.broadcast %cst : f32 to vector<4x16x16xf32>
    %89 = arith.mulf %88, %85 : vector<4x16x16xf32>
    %cst_5 = arith.constant 8.100000e-03 : f32
    %90 = vector.broadcast %cst_5 : f32 to vector<4x16x16xf32>
    %91 = arith.addf %89, %90 : vector<4x16x16xf32>
    %cst_6 = arith.constant 9.000000e+00 : f32
    %92 = vector.broadcast %cst_6 : f32 to vector<4x16x16xf32>
    %93 = arith.mulf %92, %84 : vector<4x16x16xf32>
    %94 = arith.subf %93, %85 : vector<4x16x16xf32>
    %cst_7 = arith.constant 2.000000e+00 : f32
    %95 = vector.broadcast %cst_7 : f32 to vector<4x16x16xf32>
    %96 = arith.mulf %95, %94 : vector<4x16x16xf32>
    %cst_8 = arith.constant 7.290000e-02 : f32
    %97 = vector.broadcast %cst_8 : f32 to vector<4x16x16xf32>
    %98 = arith.addf %96, %97 : vector<4x16x16xf32>
    %99 = arith.mulf %91, %98 : vector<4x16x16xf32>
    %100 = arith.addf %86, %87 : vector<4x16x16xf32>
    %cst_9 = arith.constant 8.100000e-03 : f32
    %101 = vector.broadcast %cst_9 : f32 to vector<4x16x16xf32>
    %102 = arith.addf %100, %101 : vector<4x16x16xf32>
    %103 = arith.addf %50, %67 : vector<4x16x16xf32>
    %cst_10 = arith.constant 9.000000e+00 : f32
    %104 = vector.broadcast %cst_10 : f32 to vector<4x16x16xf32>
    %105 = arith.mulf %104, %103 : vector<4x16x16xf32>
    %106 = arith.subf %105, %86 : vector<4x16x16xf32>
    %107 = arith.subf %106, %87 : vector<4x16x16xf32>
    %cst_11 = arith.constant 7.290000e-02 : f32
    %108 = vector.broadcast %cst_11 : f32 to vector<4x16x16xf32>
    %109 = arith.addf %107, %108 : vector<4x16x16xf32>
    %110 = arith.mulf %102, %109 : vector<4x16x16xf32>
    %111 = arith.divf %99, %110 : vector<4x16x16xf32>
    %cst_12 = arith.constant 1.000000e+00 : f32
    %112 = vector.broadcast %cst_12 : f32 to vector<4x16x16xf32>
    %113 = arith.subf %112, %111 : vector<4x16x16xf32>
    %cst_13 = arith.constant 5.000000e-01 : f32
    %114 = vector.broadcast %cst_13 : f32 to vector<4x16x16xf32>
    %115 = arith.mulf %113, %114 : vector<4x16x16xf32>
    %cst_14 = arith.constant 0.000000e+00 : f32
    %cst_15 = arith.constant 1.000000e+00 : f32
    %116 = vector.broadcast %cst_14 : f32 to vector<4x16x16xf32>
    %117 = arith.maximumf %116, %115 : vector<4x16x16xf32>
    %118 = vector.broadcast %cst_15 : f32 to vector<4x16x16xf32>
    %119 = arith.minimumf %118, %117 : vector<4x16x16xf32>
    %c0_16 = arith.constant 0 : index
    %c0_17 = arith.constant 0 : index
    %c0_18 = arith.constant 0 : index
    %120 = vector.load %arg3[%c0_16, %c0_17, %c0_18] : memref<4x16x16xf32, #tpu.memory_space<vmem>>, vector<4x16x16xf32>
    tpu.vector_store %arg3[%c0_16, %c0_17, %c0_18], %119 {strides = array<i32>} : memref<4x16x16xf32, #tpu.memory_space<vmem>>, vector<4x16x16xf32>,
    return
  }
  func.func @transform_0(%arg0: i32) -> (i32, i32, i32) {
    %c0_i32 = arith.constant 0 : i32
    %c0_i32_0 = arith.constant 0 : i32
    %c0_i32_1 = arith.constant 0 : i32
    return %arg0, %c0_i32, %c0_i32_0 : i32, i32, i32
  }
  func.func @transform_1(%arg0: i32) -> (i32, i32, i32) {
    %c0_i32 = arith.constant 0 : i32
    %c0_i32_0 = arith.constant 0 : i32
    %c0_i32_1 = arith.constant 0 : i32
    return %arg0, %c0_i32, %c0_i32_0 : i32, i32, i32
  }
  func.func @transform_2(%arg0: i32) -> (i32, i32, i32) {
    %c0_i32 = arith.constant 0 : i32
    %c0_i32_0 = arith.constant 0 : i32
    %c0_i32_1 = arith.constant 0 : i32
    return %arg0, %c0_i32, %c0_i32_0 : i32, i32, i32
  }
}

</mosaic_0001>

<llo_original>
// kernel: tpu_custom_call.1
$region0: #{tpu_custom_call.1}
  #allocation0 [shape = 'u32[]', space=smem, size = 0x4, offset = 0x4, fixed_abs, tag = 'smem constant byte address 0x4 - core index']
  #allocation1 [shape = 'u32[144,128]{1,0:T(1,128)}', space=vmem, size = 0x12000, scoped, tag = 'internal scratch']
  %s0 = inlined_call_operand.hbm [shape: f32[8,16,16], index: 0, kind: input, shape index: {}]
  %s1 = inlined_call_operand.hbm [shape: f32[8,16,16], index: 1, kind: input, shape index: {}]
  %s2 = inlined_call_operand.hbm [shape: f32[8,16,16], index: 2, kind: output, shape index: {}]
  %s3 = sld [smem:[#allocation0]]
  $region49: #{tpu_custom_call.1} parent=0
    _
  %s5 = ssub.s32 1, %s3
  %s6 = scalar_select 0, %s5, %s3
  $region1: #{tpu_custom_call.1} parent=0
    #allocation2 [shape = 'u8[65536]{0}', space=vmem, size = 0x10000, scoped, tag = 'input window, operand 0']
    #allocation3 [shape = 's32[2]{0}', space=sflag, size = 0x8, scoped, tag = 'scoped memory for tpu_custom_call.1']
    #allocation4 [shape = 's32[2]{0}', space=sflag, size = 0x8, scoped, tag = 'scoped memory for tpu_custom_call.1']
    #allocation5 [shape = 'u8[65536]{0}', space=vmem, size = 0x10000, scoped, tag = 'input window, operand 1']
    #allocation6 [shape = 's32[2]{0}', space=sflag, size = 0x8, scoped, tag = 'scoped memory for tpu_custom_call.1']
    #allocation7 [shape = 'u8[65536]{0}', space=vmem, size = 0x10000, scoped, tag = 'output window, operand 0']
    %7 = vsyncpa [#allocation3], 0
    %s8 = scalar_lea.sflag [#allocation3], 1
    %9 = vsyncpa %s8, 0
    %10 = vsyncpa [#allocation6], 0
    %s11 = scalar_lea.sflag [#allocation6], 1
    %12 = vsyncpa %s11, 0
    %13 = vsyncpa [#allocation4], 0
    %s14 = scalar_lea.sflag [#allocation4], 1
    %15 = vsyncpa %s14, 0
    loop: start=0, step=1, limit=4
    $region2: #{tpu_custom_call.1} parent=1 // loop_pre_header
      _
    $region3: #{tpu_custom_call.1} parent=1 // loop_header
      %s17 = sphi 0, %s21
      %p18 = scmp.ge.s32.totalorder %s17, 4
      %s27 = sphi 0, %s29
      %s30 = sphi 0, %s27
      %s31 = sphi 0, %s30
      %s47 = sphi 0, %s31
      %s53 = sphi 0, %s55
      %s56 = sphi 0, %s53
      %s57 = sphi 0, %s56
      %s73 = sphi 0, %s57
      %s79 = sphi 0, %s81
      %s82 = sphi 0, %s79
      %s83 = sphi 0, %s82
      %s99 = sphi 0, %s83
    $region4: #{tpu_custom_call.1} parent=1 // loop_header_branch
      %20 = sbr.rel (%p18) target = $region8
    $region5: #{tpu_custom_call.1} parent=1 // loop_body
      %s22 = ssub.s32 %s17, 1
      %s23 = ssub.s32 %s17, 2
      %s24 = sadd.s32 %s17, 1
      %s25 = ssub.s32 %s17, %s24
      %p26 = scmp.eq.s32.totalorder %s25, 0
      %s28 = sadd.s32 %s27, 1
      %s29 = scalar_select %p26, %s27, %s28
      %p32 = pneg %p26
      %p33 = scmp.eq.s32.totalorder %s17, 1
      %p34 = por %p32, %p33
      %p35 = scmp.ne.s32.totalorder %s27, %s30
      %p36 = scmp.eq.s32.totalorder %s17, 0
      %p37 = por %p35, %p36
      %p38 = scmp.ne.s32.totalorder %s27, %s30
      %p39 = scmp.eq.s32.totalorder %s22, 1
      %p40 = por %p38, %p39
      %p41 = scmp.ne.s32.totalorder %s30, %s31
      %p42 = scmp.eq.s32.totalorder %s22, 0
      %p43 = por %p41, %p42
      %p44 = scmp.ne.s32.totalorder %s30, %s31
      %p45 = scmp.eq.s32.totalorder %s23, 1
      %p46 = por %p44, %p45
      %p48 = scmp.ne.s32.totalorder %s31, %s47
      %p49 = scmp.eq.s32.totalorder %s23, 0
      %p50 = por %p48, %p49
      %s51 = ssub.s32 %s17, %s24
      %p52 = scmp.eq.s32.totalorder %s51, 0
      %s54 = sadd.s32 %s53, 1
      %s55 = scalar_select %p52, %s53, %s54
      %p58 = pneg %p52
      %p59 = scmp.eq.s32.totalorder %s17, 1
      %p60 = por %p58, %p59
      %p61 = scmp.ne.s32.totalorder %s53, %s56
      %p62 = scmp.eq.s32.totalorder %s17, 0
      %p63 = por %p61, %p62
      %p64 = scmp.ne.s32.totalorder %s53, %s56
      %p65 = scmp.eq.s32.totalorder %s22, 1
      %p66 = por %p64, %p65
      %p67 = scmp.ne.s32.totalorder %s56, %s57
      %p68 = scmp.eq.s32.totalorder %s22, 0
      %p69 = por %p67, %p68
      %p70 = scmp.ne.s32.totalorder %s56, %s57
      %p71 = scmp.eq.s32.totalorder %s23, 1
      %p72 = por %p70, %p71
      %p74 = scmp.ne.s32.totalorder %s57, %s73
      %p75 = scmp.eq.s32.totalorder %s23, 0
      %p76 = por %p74, %p75
      %s77 = ssub.s32 %s17, %s24
      %p78 = scmp.eq.s32.totalorder %s77, 0
      %s80 = sadd.s32 %s79, 1
      %s81 = scalar_select %p78, %s79, %s80
      %p84 = pneg %p78
      %p85 = scmp.eq.s32.totalorder %s17, 1
      %p86 = por %p84, %p85
      %p87 = scmp.ne.s32.totalorder %s79, %s82
      %p88 = scmp.eq.s32.totalorder %s17, 0
      %p89 = por %p87, %p88
      %p90 = scmp.ne.s32.totalorder %s79, %s82
      %p91 = scmp.eq.s32.totalorder %s22, 1
      %p92 = por %p90, %p91
      %p93 = scmp.ne.s32.totalorder %s82, %s83
      %p94 = scmp.eq.s32.totalorder %s22, 0
      %p95 = por %p93, %p94
      %p96 = scmp.ne.s32.totalorder %s82, %s83
      %p97 = scmp.eq.s32.totalorder %s23, 1
      %p98 = por %p96, %p97
      %p100 = scmp.ne.s32.totalorder %s83, %s99
      %p101 = scmp.eq.s32.totalorder %s23, 0
      %p102 = por %p100, %p101
      %p103 = scmp.le.s32.totalorder 1, %s17
      %p104 = scmp.lt.s32.totalorder %s17, 3
      %p105 = pnand %p103, %p104
      %p106 = pneg %p105
      // Predicated region
      $region9: #{tpu_custom_call.1} parent=5 // pred_check
        _
      $region10: #{tpu_custom_call.1} parent=5 // pred_check_branch
        %108 = sbr.rel (%p105) target = $region12
      $region11: #{tpu_custom_call.1} parent=5 // pred_region
        %s109 = ssub.s32 %s17, 1
      $region12: #{tpu_custom_call.1} parent=5 // pred_fallthru
        _
      %p110 = scmp.lt.s32.totalorder %s17, 2
      // Predicated region
      $region13: #{tpu_custom_call.1} parent=5 // pred_check
        %p111 = pneg %p110
      $region14: #{tpu_custom_call.1} parent=5 // pred_check_branch
        %113 = sbr.rel (%p111) target = $region16
      $region15: #{tpu_custom_call.1} parent=5 // pred_region
        // Predicated region
        $region17: #{tpu_custom_call.1} parent=15 // pred_check
          %p114 = pneg %p37
        $region18: #{tpu_custom_call.1} parent=15 // pred_check_branch
          %116 = sbr.rel (%p114) target = $region20
        $region19: #{tpu_custom_call.1} parent=15 // pred_region
          %s117 = sand.u32 %s27, 1
          %s118 = scalar_lea.sflag [#allocation3], %s117
          %s119 = sand.u32 %s27, 1
          %s120 = smul.addr %s119, 64
          %s121 = scalar_lea.vmem [#allocation2], %s120
          %s122 = smul.u32 4, %s17
          %s124 = ssub.s32 1024, 1024
          %125 = vsyncadd %s118, %s124
          %s126 = smul.addr %s122, 2
          %s127 = smul.addr %s126, 128
          %s128 = scalar_lea.hbm %s0, %s127
          %s129 = sshll.u32 %s121, 4
          %s130 = int_to_ptr.vmem [resolvable:$true] %s129
          %135 = dma.hbm_to_vmem [thread:$0]  %s128, 1024, %s130, %s118, 128, 128, 8
        $region20: #{tpu_custom_call.1} parent=15 // pred_fallthru
          _
        // Predicated region
        $region21: #{tpu_custom_call.1} parent=15 // pred_check
          %p136 = pneg %p63
        $region22: #{tpu_custom_call.1} parent=15 // pred_check_branch
          %138 = sbr.rel (%p136) target = $region24
        $region23: #{tpu_custom_call.1} parent=15 // pred_region
          %s139 = sand.u32 %s53, 1
          %s140 = scalar_lea.sflag [#allocation6], %s139
          %s141 = sand.u32 %s53, 1
          %s142 = smul.addr %s141, 64
          %s143 = scalar_lea.vmem [#allocation5], %s142
          %s144 = smul.u32 4, %s17
          %s146 = ssub.s32 1024, 1024
          %147 = vsyncadd %s140, %s146
          %s148 = smul.addr %s144, 2
          %s149 = smul.addr %s148, 128
          %s150 = scalar_lea.hbm %s1, %s149
          %s151 = sshll.u32 %s143, 4
          %s152 = int_to_ptr.vmem [resolvable:$true] %s151
          %157 = dma.hbm_to_vmem [thread:$0]  %s150, 1024, %s152, %s140, 128, 128, 8
        $region24: #{tpu_custom_call.1} parent=15 // pred_fallthru
          _
      $region16: #{tpu_custom_call.1} parent=5 // pred_fallthru
        _
      %p158 = scmp.le.s32.totalorder 1, %s17
      %p159 = scmp.lt.s32.totalorder %s17, 3
      %p160 = pnand %p158, %p159
      %p161 = pneg %p160
      // Predicated region
      $region25: #{tpu_custom_call.1} parent=5 // pred_check
        _
      $region26: #{tpu_custom_call.1} parent=5 // pred_check_branch
        %163 = sbr.rel (%p160) target = $region28
      $region27: #{tpu_custom_call.1} parent=5 // pred_region
        %s164 = ssub.s32 %s17, 1
        %s165 = sand.u32 %s30, 1
        %s166 = scalar_lea.sflag [#allocation3], %s165
        %s167 = sand.u32 %s30, 1
        %s168 = smul.addr %s167, 64
        %s169 = scalar_lea.vmem [#allocation2], %s168
        // Predicated region
        $region29: #{tpu_custom_call.1} parent=27 // pred_check
          %p170 = pneg %p43
        $region30: #{tpu_custom_call.1} parent=27 // pred_check_branch
          %172 = sbr.rel (%p170) target = $region32
        $region31: #{tpu_custom_call.1} parent=27 // pred_region
          %173 = dma.done %s166, 1024
        $region32: #{tpu_custom_call.1} parent=27 // pred_fallthru
          _
        %s174 = sand.u32 %s56, 1
        %s175 = scalar_lea.sflag [#allocation6], %s174
        %s176 = sand.u32 %s56, 1
        %s177 = smul.addr %s176, 64
        %s178 = scalar_lea.vmem [#allocation5], %s177
        // Predicated region
        $region33: #{tpu_custom_call.1} parent=27 // pred_check
          %p179 = pneg %p69
        $region34: #{tpu_custom_call.1} parent=27 // pred_check_branch
          %181 = sbr.rel (%p179) target = $region36
        $region35: #{tpu_custom_call.1} parent=27 // pred_region
          %182 = dma.done %s175, 1024
        $region36: #{tpu_custom_call.1} parent=27 // pred_fallthru
          _
        %s183 = sand.u32 %s30, 1
        %s184 = scalar_lea.sflag [#allocation3], %s183
        %s185 = sand.u32 %s30, 1
        %s186 = smul.addr %s185, 64
        %s187 = scalar_lea.vmem [#allocation2], %s186
        %p188 = pneg %p43
        %p189 = pneg %p40
        %s190 = sand.u32 %s56, 1
        %s191 = scalar_lea.sflag [#allocation6], %s190
        %s192 = sand.u32 %s56, 1
        %s193 = smul.addr %s192, 64
        %s194 = scalar_lea.vmem [#allocation5], %s193
        %p195 = pneg %p69
        %p196 = pneg %p66
        %p197 = pneg %p95
        %p198 = pneg %p92
        %s199 = sand.u32 %s82, 1
        %s200 = scalar_lea.sflag [#allocation4], %s199
        %s201 = sand.u32 %s82, 1
        %s202 = smul.addr %s201, 64
        %s203 = scalar_lea.vmem [#allocation7], %s202
        %s204 = smul.u32 4, %s22
        %s205 = smul.u32 4, %s22
        %s206 = smul.u32 4, %s22
        %v207 = vld [vmem:[%s169] sm:$0xff]
        %v208 = vld [vmem:[%s169 + $0x8] sm:$0xff]
        %v209 = vld [vmem:[%s169 + $0x10] sm:$0xff]
        %v210 = vld [vmem:[%s169 + $0x18] sm:$0xff]
        %v211 = vld [vmem:[%s169 + $0x20] sm:$0xff]
        %v212 = vld [vmem:[%s169 + $0x28] sm:$0xff]
        %v213 = vld [vmem:[%s169 + $0x30] sm:$0xff]
        %v214 = vld [vmem:[%s169 + $0x38] sm:$0xff]
        %v215 = vld [vmem:[%s178] sm:$0xff]
        %v216 = vld [vmem:[%s178 + $0x8] sm:$0xff]
        %v217 = vld [vmem:[%s178 + $0x10] sm:$0xff]
        %v218 = vld [vmem:[%s178 + $0x18] sm:$0xff]
        %v219 = vld [vmem:[%s178 + $0x20] sm:$0xff]
        %v220 = vld [vmem:[%s178 + $0x28] sm:$0xff]
        %v221 = vld [vmem:[%s178 + $0x30] sm:$0xff]
        %v222 = vld [vmem:[%s178 + $0x38] sm:$0xff]
        %v227 = vrot.slane %v207, 1
        %v228 = vrot.slane %v209, 1
        %v229 = vrot.slane %v211, 1
        %v230 = vrot.slane %v213, 1
        %vm239 = vcmask 1040384
        %v240 = vrot.slane %v207, 7
        %v241 = vrot.slane %v208, 7
        %v242 = vsel %vm239, %v240, %v241
        %v243 = vrot.slane %v209, 7
        %v244 = vrot.slane %v210, 7
        %v245 = vsel %vm239, %v243, %v244
        %v246 = vrot.slane %v211, 7
        %v247 = vrot.slane %v212, 7
        %v248 = vsel %vm239, %v246, %v247
        %v249 = vrot.slane %v213, 7
        %v250 = vrot.slane %v214, 7
        %v251 = vsel %vm239, %v249, %v250
        %v260 = vsel %vm239, %v227, %v240
        %v261 = vsel %vm239, %v228, %v243
        %v262 = vsel %vm239, %v229, %v246
        %v263 = vsel %vm239, %v230, %v249
        %vm264 = vcmask 1046528
        %v265 = vrot.slane %v208, 1
        %v266 = vsel %vm264, %v227, %v265
        %v267 = vrot.slane %v210, 1
        %v268 = vsel %vm264, %v228, %v267
        %v269 = vrot.slane %v212, 1
        %v270 = vsel %vm264, %v229, %v269
        %v271 = vrot.slane %v214, 1
        %v272 = vsel %vm264, %v230, %v271
        %v285 = vsel %vm264, %v265, %v241
        %v286 = vsel %vm264, %v267, %v244
        %v287 = vsel %vm264, %v269, %v247
        %v288 = vsel %vm264, %v271, %v250
        %v289 = vadd.f32 %v207, %v260
        %v290 = vadd.f32 %v208, %v242
        %v291 = vadd.f32 %v209, %v261
        %v292 = vadd.f32 %v210, %v245
        %v293 = vadd.f32 %v211, %v262
        %v294 = vadd.f32 %v212, %v248
        %v295 = vadd.f32 %v213, %v263
        %v296 = vadd.f32 %v214, %v251
        %v297 = vadd.f32 %v289, %v266
        %v298 = vadd.f32 %v290, %v285
        %v299 = vadd.f32 %v291, %v268
        %v300 = vadd.f32 %v292, %v286
        %v301 = vadd.f32 %v293, %v270
        %v302 = vadd.f32 %v294, %v287
        %v303 = vadd.f32 %v295, %v272
        %v304 = vadd.f32 %v296, %v288
        %313 = vrot.lane.b32.xlu0 %v297, 127
        %v314 = vpop.permute.xlu0 %313
        %315 = vrot.lane.b32.xlu0 %v298, 127
        %v316 = vpop.permute.xlu0 %315
        %317 = vrot.lane.b32.xlu0 %v299, 127
        %v318 = vpop.permute.xlu0 %317
        %319 = vrot.lane.b32.xlu0 %v300, 127
        %v320 = vpop.permute.xlu0 %319
        %321 = vrot.lane.b32.xlu0 %v301, 127
        %v322 = vpop.permute.xlu0 %321
        %323 = vrot.lane.b32.xlu0 %v302, 127
        %v324 = vpop.permute.xlu0 %323
        %325 = vrot.lane.b32.xlu0 %v303, 127
        %v326 = vpop.permute.xlu0 %325
        %327 = vrot.lane.b32.xlu0 %v304, 127
        %v328 = vpop.permute.xlu0 %327
        %337 = vrot.lane.b32.xlu0 %v297, 1
        %v338 = vpop.permute.xlu0 %337
        %339 = vrot.lane.b32.xlu0 %v298, 1
        %v340 = vpop.permute.xlu0 %339
        %341 = vrot.lane.b32.xlu0 %v299, 1
        %v342 = vpop.permute.xlu0 %341
        %343 = vrot.lane.b32.xlu0 %v300, 1
        %v344 = vpop.permute.xlu0 %343
        %345 = vrot.lane.b32.xlu0 %v301, 1
        %v346 = vpop.permute.xlu0 %345
        %347 = vrot.lane.b32.xlu0 %v302, 1
        %v348 = vpop.permute.xlu0 %347
        %349 = vrot.lane.b32.xlu0 %v303, 1
        %v350 = vpop.permute.xlu0 %349
        %351 = vrot.lane.b32.xlu0 %v304, 1
        %v352 = vpop.permute.xlu0 %351
        %vm361 = vcmask 7168
        %v362 = vsel %vm361, %v314, %v338
        %v363 = vsel %vm361, %v316, %v340
        %v364 = vsel %vm361, %v318, %v342
        %v365 = vsel %vm361, %v320, %v344
        %v366 = vsel %vm361, %v322, %v346
        %v367 = vsel %vm361, %v324, %v348
        %v368 = vsel %vm361, %v326, %v350
        %v369 = vsel %vm361, %v328, %v352
        %vm370 = vcmask 121856
        %v371 = vsel %vm370, %v314, %v338
        %v372 = vsel %vm370, %v316, %v340
        %v373 = vsel %vm370, %v318, %v342
        %v374 = vsel %vm370, %v320, %v344
        %v375 = vsel %vm370, %v322, %v346
        %v376 = vsel %vm370, %v324, %v348
        %v377 = vsel %vm370, %v326, %v350
        %v378 = vsel %vm370, %v328, %v352
        %v379 = vadd.f32 %v297, %v362
        %v380 = vadd.f32 %v298, %v363
        %v381 = vadd.f32 %v299, %v364
        %v382 = vadd.f32 %v300, %v365
        %v383 = vadd.f32 %v301, %v366
        %v384 = vadd.f32 %v302, %v367
        %v385 = vadd.f32 %v303, %v368
        %v386 = vadd.f32 %v304, %v369
        %v387 = vadd.f32 %v379, %v371
        %v388 = vadd.f32 %v380, %v372
        %v389 = vadd.f32 %v381, %v373
        %v390 = vadd.f32 %v382, %v374
        %v391 = vadd.f32 %v383, %v375
        %v392 = vadd.f32 %v384, %v376
        %v393 = vadd.f32 %v385, %v377
        %v394 = vadd.f32 %v386, %v378
        %v399 = vrot.slane %v215, 1
        %v400 = vrot.slane %v217, 1
        %v401 = vrot.slane %v219, 1
        %v402 = vrot.slane %v221, 1
        %v411 = vrot.slane %v215, 7
        %v412 = vrot.slane %v216, 7
        %v413 = vsel %vm239, %v411, %v412
        %v414 = vrot.slane %v217, 7
        %v415 = vrot.slane %v218, 7
        %v416 = vsel %vm239, %v414, %v415
        %v417 = vrot.slane %v219, 7
        %v418 = vrot.slane %v220, 7
        %v419 = vsel %vm239, %v417, %v418
        %v420 = vrot.slane %v221, 7
        %v421 = vrot.slane %v222, 7
        %v422 = vsel %vm239, %v420, %v421
        %v431 = vsel %vm239, %v399, %v411
        %v432 = vsel %vm239, %v400, %v414
        %v433 = vsel %vm239, %v401, %v417
        %v434 = vsel %vm239, %v402, %v420
        %v435 = vrot.slane %v216, 1
        %v436 = vsel %vm264, %v399, %v435
        %v437 = vrot.slane %v218, 1
        %v438 = vsel %vm264, %v400, %v437
        %v439 = vrot.slane %v220, 1
        %v440 = vsel %vm264, %v401, %v439
        %v441 = vrot.slane %v222, 1
        %v442 = vsel %vm264, %v402, %v441
        %v455 = vsel %vm264, %v435, %v412
        %v456 = vsel %vm264, %v437, %v415
        %v457 = vsel %vm264, %v439, %v418
        %v458 = vsel %vm264, %v441, %v421
        %v459 = vadd.f32 %v215, %v431
        %v460 = vadd.f32 %v216, %v413
        %v461 = vadd.f32 %v217, %v432
        %v462 = vadd.f32 %v218, %v416
        %v463 = vadd.f32 %v219, %v433
        %v464 = vadd.f32 %v220, %v419
        %v465 = vadd.f32 %v221, %v434
        %v466 = vadd.f32 %v222, %v422
        %v467 = vadd.f32 %v459, %v436
        %v468 = vadd.f32 %v460, %v455
        %v469 = vadd.f32 %v461, %v438
        %v470 = vadd.f32 %v462, %v456
        %v471 = vadd.f32 %v463, %v440
        %v472 = vadd.f32 %v464, %v457
        %v473 = vadd.f32 %v465, %v442
        %v474 = vadd.f32 %v466, %v458
        %483 = vrot.lane.b32.xlu0 %v467, 127
        %v484 = vpop.permute.xlu0 %483
        %485 = vrot.lane.b32.xlu0 %v468, 127
        %v486 = vpop.permute.xlu0 %485
        %487 = vrot.lane.b32.xlu0 %v469, 127
        %v488 = vpop.permute.xlu0 %487
        %489 = vrot.lane.b32.xlu0 %v470, 127
        %v490 = vpop.permute.xlu0 %489
        %491 = vrot.lane.b32.xlu0 %v471, 127
        %v492 = vpop.permute.xlu0 %491
        %493 = vrot.lane.b32.xlu0 %v472, 127
        %v494 = vpop.permute.xlu0 %493
        %495 = vrot.lane.b32.xlu0 %v473, 127
        %v496 = vpop.permute.xlu0 %495
        %497 = vrot.lane.b32.xlu0 %v474, 127
        %v498 = vpop.permute.xlu0 %497
        %507 = vrot.lane.b32.xlu0 %v467, 1
        %v508 = vpop.permute.xlu0 %507
        %509 = vrot.lane.b32.xlu0 %v468, 1
        %v510 = vpop.permute.xlu0 %509
        %511 = vrot.lane.b32.xlu0 %v469, 1
        %v512 = vpop.permute.xlu0 %511
        %513 = vrot.lane.b32.xlu0 %v470, 1
        %v514 = vpop.permute.xlu0 %513
        %515 = vrot.lane.b32.xlu0 %v471, 1
        %v516 = vpop.permute.xlu0 %515
        %517 = vrot.lane.b32.xlu0 %v472, 1
        %v518 = vpop.permute.xlu0 %517
        %519 = vrot.lane.b32.xlu0 %v473, 1
        %v520 = vpop.permute.xlu0 %519
        %521 = vrot.lane.b32.xlu0 %v474, 1
        %v522 = vpop.permute.xlu0 %521
        %v531 = vsel %vm361, %v484, %v508
        %v532 = vsel %vm361, %v486, %v510
        %v533 = vsel %vm361, %v488, %v512
        %v534 = vsel %vm361, %v490, %v514
        %v535 = vsel %vm361, %v492, %v516
        %v536 = vsel %vm361, %v494, %v518
        %v537 = vsel %vm361, %v496, %v520
        %v538 = vsel %vm361, %v498, %v522
        %v539 = vsel %vm370, %v484, %v508
        %v540 = vsel %vm370, %v486, %v510
        %v541 = vsel %vm370, %v488, %v512
        %v542 = vsel %vm370, %v490, %v514
        %v543 = vsel %vm370, %v492, %v516
        %v544 = vsel %vm370, %v494, %v518
        %v545 = vsel %vm370, %v496, %v520
        %v546 = vsel %vm370, %v498, %v522
        %v547 = vadd.f32 %v467, %v531
        %v548 = vadd.f32 %v468, %v532
        %v549 = vadd.f32 %v469, %v533
        %v550 = vadd.f32 %v470, %v534
        %v551 = vadd.f32 %v471, %v535
        %v552 = vadd.f32 %v472, %v536
        %v553 = vadd.f32 %v473, %v537
        %v554 = vadd.f32 %v474, %v538
        %v555 = vadd.f32 %v547, %v539
        %v556 = vadd.f32 %v548, %v540
        %v557 = vadd.f32 %v549, %v541
        %v558 = vadd.f32 %v550, %v542
        %v559 = vadd.f32 %v551, %v543
        %v560 = vadd.f32 %v552, %v544
        %v561 = vadd.f32 %v553, %v545
        %v562 = vadd.f32 %v554, %v546
        %v563 = vmul.f32 %v207, %v207
        %v564 = vmul.f32 %v208, %v208
        %v565 = vmul.f32 %v209, %v209
        %v566 = vmul.f32 %v210, %v210
        %v567 = vmul.f32 %v211, %v211
        %v568 = vmul.f32 %v212, %v212
        %v569 = vmul.f32 %v213, %v213
        %v570 = vmul.f32 %v214, %v214
        %v575 = vrot.slane %v563, 1
        %v576 = vrot.slane %v565, 1
        %v577 = vrot.slane %v567, 1
        %v578 = vrot.slane %v569, 1
        %v587 = vrot.slane %v563, 7
        %v588 = vrot.slane %v564, 7
        %v589 = vsel %vm239, %v587, %v588
        %v590 = vrot.slane %v565, 7
        %v591 = vrot.slane %v566, 7
        %v592 = vsel %vm239, %v590, %v591
        %v593 = vrot.slane %v567, 7
        %v594 = vrot.slane %v568, 7
        %v595 = vsel %vm239, %v593, %v594
        %v596 = vrot.slane %v569, 7
        %v597 = vrot.slane %v570, 7
        %v598 = vsel %vm239, %v596, %v597
        %v607 = vsel %vm239, %v575, %v587
        %v608 = vsel %vm239, %v576, %v590
        %v609 = vsel %vm239, %v577, %v593
        %v610 = vsel %vm239, %v578, %v596
        %v611 = vrot.slane %v564, 1
        %v612 = vsel %vm264, %v575, %v611
        %v613 = vrot.slane %v566, 1
        %v614 = vsel %vm264, %v576, %v613
        %v615 = vrot.slane %v568, 1
        %v616 = vsel %vm264, %v577, %v615
        %v617 = vrot.slane %v570, 1
        %v618 = vsel %vm264, %v578, %v617
        %v631 = vsel %vm264, %v611, %v588
        %v632 = vsel %vm264, %v613, %v591
        %v633 = vsel %vm264, %v615, %v594
        %v634 = vsel %vm264, %v617, %v597
        %v635 = vadd.f32 %v563, %v607
        %v636 = vadd.f32 %v564, %v589
        %v637 = vadd.f32 %v565, %v608
        %v638 = vadd.f32 %v566, %v592
        %v639 = vadd.f32 %v567, %v609
        %v640 = vadd.f32 %v568, %v595
        %v641 = vadd.f32 %v569, %v610
        %v642 = vadd.f32 %v570, %v598
        %v643 = vadd.f32 %v635, %v612
        %v644 = vadd.f32 %v636, %v631
        %v645 = vadd.f32 %v637, %v614
        %v646 = vadd.f32 %v638, %v632
        %v647 = vadd.f32 %v639, %v616
        %v648 = vadd.f32 %v640, %v633
        %v649 = vadd.f32 %v641, %v618
        %v650 = vadd.f32 %v642, %v634
        %659 = vrot.lane.b32.xlu0 %v643, 127
        %v660 = vpop.permute.xlu0 %659
        %661 = vrot.lane.b32.xlu0 %v644, 127
        %v662 = vpop.permute.xlu0 %661
        %663 = vrot.lane.b32.xlu0 %v645, 127
        %v664 = vpop.permute.xlu0 %663
        %665 = vrot.lane.b32.xlu0 %v646, 127
        %v666 = vpop.permute.xlu0 %665
        %667 = vrot.lane.b32.xlu0 %v647, 127
        %v668 = vpop.permute.xlu0 %667
        %669 = vrot.lane.b32.xlu0 %v648, 127
        %v670 = vpop.permute.xlu0 %669
        %671 = vrot.lane.b32.xlu0 %v649, 127
        %v672 = vpop.permute.xlu0 %671
        %673 = vrot.lane.b32.xlu0 %v650, 127
        %v674 = vpop.permute.xlu0 %673
        %683 = vrot.lane.b32.xlu0 %v643, 1
        %v684 = vpop.permute.xlu0 %683
        %685 = vrot.lane.b32.xlu0 %v644, 1
        %v686 = vpop.permute.xlu0 %685
        %687 = vrot.lane.b32.xlu0 %v645, 1
        %v688 = vpop.permute.xlu0 %687
        %689 = vrot.lane.b32.xlu0 %v646, 1
        %v690 = vpop.permute.xlu0 %689
        %691 = vrot.lane.b32.xlu0 %v647, 1
        %v692 = vpop.permute.xlu0 %691
        %693 = vrot.lane.b32.xlu0 %v648, 1
        %v694 = vpop.permute.xlu0 %693
        %695 = vrot.lane.b32.xlu0 %v649, 1
        %v696 = vpop.permute.xlu0 %695
        %697 = vrot.lane.b32.xlu0 %v650, 1
        %v698 = vpop.permute.xlu0 %697
        %v707 = vsel %vm361, %v660, %v684
        %v708 = vsel %vm361, %v662, %v686
        %v709 = vsel %vm361, %v664, %v688
        %v710 = vsel %vm361, %v666, %v690
        %v711 = vsel %vm361, %v668, %v692
        %v712 = vsel %vm361, %v670, %v694
        %v713 = vsel %vm361, %v672, %v696
        %v714 = vsel %vm361, %v674, %v698
        %v715 = vsel %vm370, %v660, %v684
        %v716 = vsel %vm370, %v662, %v686
        %v717 = vsel %vm370, %v664, %v688
        %v718 = vsel %vm370, %v666, %v690
        %v719 = vsel %vm370, %v668, %v692
        %v720 = vsel %vm370, %v670, %v694
        %v721 = vsel %vm370, %v672, %v696
        %v722 = vsel %vm370, %v674, %v698
        %v723 = vadd.f32 %v643, %v707
        %v724 = vadd.f32 %v644, %v708
        %v725 = vadd.f32 %v645, %v709
        %v726 = vadd.f32 %v646, %v710
        %v727 = vadd.f32 %v647, %v711
        %v728 = vadd.f32 %v648, %v712
        %v729 = vadd.f32 %v649, %v713
        %v730 = vadd.f32 %v650, %v714
        %v731 = vadd.f32 %v723, %v715
        %v732 = vadd.f32 %v724, %v716
        %v733 = vadd.f32 %v725, %v717
        %v734 = vadd.f32 %v726, %v718
        %v735 = vadd.f32 %v727, %v719
        %v736 = vadd.f32 %v728, %v720
        %v737 = vadd.f32 %v729, %v721
        %v738 = vadd.f32 %v730, %v722
        %v739 = vmul.f32 %v215, %v215
        %v740 = vmul.f32 %v216, %v216
        %v741 = vmul.f32 %v217, %v217
        %v742 = vmul.f32 %v218, %v218
        %v743 = vmul.f32 %v219, %v219
        %v744 = vmul.f32 %v220, %v220
        %v745 = vmul.f32 %v221, %v221
        %v746 = vmul.f32 %v222, %v222
        %v751 = vrot.slane %v739, 1
        %v752 = vrot.slane %v741, 1
        %v753 = vrot.slane %v743, 1
        %v754 = vrot.slane %v745, 1
        %v763 = vrot.slane %v739, 7
        %v764 = vrot.slane %v740, 7
        %v765 = vsel %vm239, %v763, %v764
        %v766 = vrot.slane %v741, 7
        %v767 = vrot.slane %v742, 7
        %v768 = vsel %vm239, %v766, %v767
        %v769 = vrot.slane %v743, 7
        %v770 = vrot.slane %v744, 7
        %v771 = vsel %vm239, %v769, %v770
        %v772 = vrot.slane %v745, 7
        %v773 = vrot.slane %v746, 7
        %v774 = vsel %vm239, %v772, %v773
        %v783 = vsel %vm239, %v751, %v763
        %v784 = vsel %vm239, %v752, %v766
        %v785 = vsel %vm239, %v753, %v769
        %v786 = vsel %vm239, %v754, %v772
        %v787 = vrot.slane %v740, 1
        %v788 = vsel %vm264, %v751, %v787
        %v789 = vrot.slane %v742, 1
        %v790 = vsel %vm264, %v752, %v789
        %v791 = vrot.slane %v744, 1
        %v792 = vsel %vm264, %v753, %v791
        %v793 = vrot.slane %v746, 1
        %v794 = vsel %vm264, %v754, %v793
        %v807 = vsel %vm264, %v787, %v764
        %v808 = vsel %vm264, %v789, %v767
        %v809 = vsel %vm264, %v791, %v770
        %v810 = vsel %vm264, %v793, %v773
        %v811 = vadd.f32 %v739, %v783
        %v812 = vadd.f32 %v740, %v765
        %v813 = vadd.f32 %v741, %v784
        %v814 = vadd.f32 %v742, %v768
        %v815 = vadd.f32 %v743, %v785
        %v816 = vadd.f32 %v744, %v771
        %v817 = vadd.f32 %v745, %v786
        %v818 = vadd.f32 %v746, %v774
        %v819 = vadd.f32 %v811, %v788
        %v820 = vadd.f32 %v812, %v807
        %v821 = vadd.f32 %v813, %v790
        %v822 = vadd.f32 %v814, %v808
        %v823 = vadd.f32 %v815, %v792
        %v824 = vadd.f32 %v816, %v809
        %v825 = vadd.f32 %v817, %v794
        %v826 = vadd.f32 %v818, %v810
        %835 = vrot.lane.b32.xlu0 %v819, 127
        %v836 = vpop.permute.xlu0 %835
        %837 = vrot.lane.b32.xlu0 %v820, 127
        %v838 = vpop.permute.xlu0 %837
        %839 = vrot.lane.b32.xlu0 %v821, 127
        %v840 = vpop.permute.xlu0 %839
        %841 = vrot.lane.b32.xlu0 %v822, 127
        %v842 = vpop.permute.xlu0 %841
        %843 = vrot.lane.b32.xlu0 %v823, 127
        %v844 = vpop.permute.xlu0 %843
        %845 = vrot.lane.b32.xlu0 %v824, 127
        %v846 = vpop.permute.xlu0 %845
        %847 = vrot.lane.b32.xlu0 %v825, 127
        %v848 = vpop.permute.xlu0 %847
        %849 = vrot.lane.b32.xlu0 %v826, 127
        %v850 = vpop.permute.xlu0 %849
        %859 = vrot.lane.b32.xlu0 %v819, 1
        %v860 = vpop.permute.xlu0 %859
        %861 = vrot.lane.b32.xlu0 %v820, 1
        %v862 = vpop.permute.xlu0 %861
        %863 = vrot.lane.b32.xlu0 %v821, 1
        %v864 = vpop.permute.xlu0 %863
        %865 = vrot.lane.b32.xlu0 %v822, 1
        %v866 = vpop.permute.xlu0 %865
        %867 = vrot.lane.b32.xlu0 %v823, 1
        %v868 = vpop.permute.xlu0 %867
        %869 = vrot.lane.b32.xlu0 %v824, 1
        %v870 = vpop.permute.xlu0 %869
        %871 = vrot.lane.b32.xlu0 %v825, 1
        %v872 = vpop.permute.xlu0 %871
        %873 = vrot.lane.b32.xlu0 %v826, 1
        %v874 = vpop.permute.xlu0 %873
        %v883 = vsel %vm361, %v836, %v860
        %v884 = vsel %vm361, %v838, %v862
        %v885 = vsel %vm361, %v840, %v864
        %v886 = vsel %vm361, %v842, %v866
        %v887 = vsel %vm361, %v844, %v868
        %v888 = vsel %vm361, %v846, %v870
        %v889 = vsel %vm361, %v848, %v872
        %v890 = vsel %vm361, %v850, %v874
        %v891 = vsel %vm370, %v836, %v860
        %v892 = vsel %vm370, %v838, %v862
        %v893 = vsel %vm370, %v840, %v864
        %v894 = vsel %vm370, %v842, %v866
        %v895 = vsel %vm370, %v844, %v868
        %v896 = vsel %vm370, %v846, %v870
        %v897 = vsel %vm370, %v848, %v872
        %v898 = vsel %vm370, %v850, %v874
        %v899 = vadd.f32 %v819, %v883
        %v900 = vadd.f32 %v820, %v884
        %v901 = vadd.f32 %v821, %v885
        %v902 = vadd.f32 %v822, %v886
        %v903 = vadd.f32 %v823, %v887
        %v904 = vadd.f32 %v824, %v888
        %v905 = vadd.f32 %v825, %v889
        %v906 = vadd.f32 %v826, %v890
        %v907 = vadd.f32 %v899, %v891
        %v908 = vadd.f32 %v900, %v892
        %v909 = vadd.f32 %v901, %v893
        %v910 = vadd.f32 %v902, %v894
        %v911 = vadd.f32 %v903, %v895
        %v912 = vadd.f32 %v904, %v896
        %v913 = vadd.f32 %v905, %v897
        %v914 = vadd.f32 %v906, %v898
        %v915 = vmul.f32 %v207, %v215
        %v916 = vmul.f32 %v208, %v216
        %v917 = vmul.f32 %v209, %v217
        %v918 = vmul.f32 %v210, %v218
        %v919 = vmul.f32 %v211, %v219
        %v920 = vmul.f32 %v212, %v220
        %v921 = vmul.f32 %v213, %v221
        %v922 = vmul.f32 %v214, %v222
        %v927 = vrot.slane %v915, 1
        %v928 = vrot.slane %v917, 1
        %v929 = vrot.slane %v919, 1
        %v930 = vrot.slane %v921, 1
        %v939 = vrot.slane %v915, 7
        %v940 = vrot.slane %v916, 7
        %v941 = vsel %vm239, %v939, %v940
        %v942 = vrot.slane %v917, 7
        %v943 = vrot.slane %v918, 7
        %v944 = vsel %vm239, %v942, %v943
        %v945 = vrot.slane %v919, 7
        %v946 = vrot.slane %v920, 7
        %v947 = vsel %vm239, %v945, %v946
        %v948 = vrot.slane %v921, 7
        %v949 = vrot.slane %v922, 7
        %v950 = vsel %vm239, %v948, %v949
        %v959 = vsel %vm239, %v927, %v939
        %v960 = vsel %vm239, %v928, %v942
        %v961 = vsel %vm239, %v929, %v945
        %v962 = vsel %vm239, %v930, %v948
        %v963 = vrot.slane %v916, 1
        %v964 = vsel %vm264, %v927, %v963
        %v965 = vrot.slane %v918, 1
        %v966 = vsel %vm264, %v928, %v965
        %v967 = vrot.slane %v920, 1
        %v968 = vsel %vm264, %v929, %v967
        %v969 = vrot.slane %v922, 1
        %v970 = vsel %vm264, %v930, %v969
        %v983 = vsel %vm264, %v963, %v940
        %v984 = vsel %vm264, %v965, %v943
        %v985 = vsel %vm264, %v967, %v946
        %v986 = vsel %vm264, %v969, %v949
        %v987 = vadd.f32 %v915, %v959
        %v988 = vadd.f32 %v916, %v941
        %v989 = vadd.f32 %v917, %v960
        %v990 = vadd.f32 %v918, %v944
        %v991 = vadd.f32 %v919, %v961
        %v992 = vadd.f32 %v920, %v947
        %v993 = vadd.f32 %v921, %v962
        %v994 = vadd.f32 %v922, %v950
        %v995 = vadd.f32 %v987, %v964
        %v996 = vadd.f32 %v988, %v983
        %v997 = vadd.f32 %v989, %v966
        %v998 = vadd.f32 %v990, %v984
        %v999 = vadd.f32 %v991, %v968
        %v1000 = vadd.f32 %v992, %v985
        %v1001 = vadd.f32 %v993, %v970
        %v1002 = vadd.f32 %v994, %v986
        %1011 = vrot.lane.b32.xlu0 %v995, 127
        %v1012 = vpop.permute.xlu0 %1011
        %1013 = vrot.lane.b32.xlu0 %v996, 127
        %v1014 = vpop.permute.xlu0 %1013
        %1015 = vrot.lane.b32.xlu0 %v997, 127
        %v1016 = vpop.permute.xlu0 %1015
        %1017 = vrot.lane.b32.xlu0 %v998, 127
        %v1018 = vpop.permute.xlu0 %1017
        %1019 = vrot.lane.b32.xlu0 %v999, 127
        %v1020 = vpop.permute.xlu0 %1019
        %1021 = vrot.lane.b32.xlu0 %v1000, 127
        %v1022 = vpop.permute.xlu0 %1021
        %1023 = vrot.lane.b32.xlu0 %v1001, 127
        %v1024 = vpop.permute.xlu0 %1023
        %1025 = vrot.lane.b32.xlu0 %v1002, 127
        %v1026 = vpop.permute.xlu0 %1025
        %1035 = vrot.lane.b32.xlu0 %v995, 1
        %v1036 = vpop.permute.xlu0 %1035
        %1037 = vrot.lane.b32.xlu0 %v996, 1
        %v1038 = vpop.permute.xlu0 %1037
        %1039 = vrot.lane.b32.xlu0 %v997, 1
        %v1040 = vpop.permute.xlu0 %1039
        %1041 = vrot.lane.b32.xlu0 %v998, 1
        %v1042 = vpop.permute.xlu0 %1041
        %1043 = vrot.lane.b32.xlu0 %v999, 1
        %v1044 = vpop.permute.xlu0 %1043
        %1045 = vrot.lane.b32.xlu0 %v1000, 1
        %v1046 = vpop.permute.xlu0 %1045
        %1047 = vrot.lane.b32.xlu0 %v1001, 1
        %v1048 = vpop.permute.xlu0 %1047
        %1049 = vrot.lane.b32.xlu0 %v1002, 1
        %v1050 = vpop.permute.xlu0 %1049
        %v1059 = vsel %vm361, %v1012, %v1036
        %v1060 = vsel %vm361, %v1014, %v1038
        %v1061 = vsel %vm361, %v1016, %v1040
        %v1062 = vsel %vm361, %v1018, %v1042
        %v1063 = vsel %vm361, %v1020, %v1044
        %v1064 = vsel %vm361, %v1022, %v1046
        %v1065 = vsel %vm361, %v1024, %v1048
        %v1066 = vsel %vm361, %v1026, %v1050
        %v1067 = vsel %vm370, %v1012, %v1036
        %v1068 = vsel %vm370, %v1014, %v1038
        %v1069 = vsel %vm370, %v1016, %v1040
        %v1070 = vsel %vm370, %v1018, %v1042
        %v1071 = vsel %vm370, %v1020, %v1044
        %v1072 = vsel %vm370, %v1022, %v1046
        %v1073 = vsel %vm370, %v1024, %v1048
        %v1074 = vsel %vm370, %v1026, %v1050
        %v1075 = vadd.f32 %v995, %v1059
        %v1076 = vadd.f32 %v996, %v1060
        %v1077 = vadd.f32 %v997, %v1061
        %v1078 = vadd.f32 %v998, %v1062
        %v1079 = vadd.f32 %v999, %v1063
        %v1080 = vadd.f32 %v1000, %v1064
        %v1081 = vadd.f32 %v1001, %v1065
        %v1082 = vadd.f32 %v1002, %v1066
        %v1083 = vadd.f32 %v1075, %v1067
        %v1084 = vadd.f32 %v1076, %v1068
        %v1085 = vadd.f32 %v1077, %v1069
        %v1086 = vadd.f32 %v1078, %v1070
        %v1087 = vadd.f32 %v1079, %v1071
        %v1088 = vadd.f32 %v1080, %v1072
        %v1089 = vadd.f32 %v1081, %v1073
        %v1090 = vadd.f32 %v1082, %v1074
        %v1091 = vmul.f32 %v387, %v555
        %v1092 = vmul.f32 %v388, %v556
        %v1093 = vmul.f32 %v389, %v557
        %v1094 = vmul.f32 %v390, %v558
        %v1095 = vmul.f32 %v391, %v559
        %v1096 = vmul.f32 %v392, %v560
        %v1097 = vmul.f32 %v393, %v561
        %v1098 = vmul.f32 %v394, %v562
        %v1099 = vmul.f32 %v387, %v387
        %v1100 = vmul.f32 %v388, %v388
        %v1101 = vmul.f32 %v389, %v389
        %v1102 = vmul.f32 %v390, %v390
        %v1103 = vmul.f32 %v391, %v391
        %v1104 = vmul.f32 %v392, %v392
        %v1105 = vmul.f32 %v393, %v393
        %v1106 = vmul.f32 %v394, %v394
        %v1107 = vmul.f32 %v555, %v555
        %v1108 = vmul.f32 %v556, %v556
        %v1109 = vmul.f32 %v557, %v557
        %v1110 = vmul.f32 %v558, %v558
        %v1111 = vmul.f32 %v559, %v559
        %v1112 = vmul.f32 %v560, %v560
        %v1113 = vmul.f32 %v561, %v561
        %v1114 = vmul.f32 %v562, %v562
        %v1115 = vmul.f32 %v1091, 2.0
        %v1116 = vmul.f32 %v1092, 2.0
        %v1117 = vmul.f32 %v1093, 2.0
        %v1118 = vmul.f32 %v1094, 2.0
        %v1119 = vmul.f32 %v1095, 2.0
        %v1120 = vmul.f32 %v1096, 2.0
        %v1121 = vmul.f32 %v1097, 2.0
        %v1122 = vmul.f32 %v1098, 2.0
        %v1123 = vadd.f32 %v1115, 0.0081
        %v1124 = vadd.f32 %v1116, 0.0081
        %v1125 = vadd.f32 %v1117, 0.0081
        %v1126 = vadd.f32 %v1118, 0.0081
        %v1127 = vadd.f32 %v1119, 0.0081
        %v1128 = vadd.f32 %v1120, 0.0081
        %v1129 = vadd.f32 %v1121, 0.0081
        %v1130 = vadd.f32 %v1122, 0.0081
        %v1131 = vmul.f32 %v1083, 9.0
        %v1132 = vmul.f32 %v1084, 9.0
        %v1133 = vmul.f32 %v1085, 9.0
        %v1134 = vmul.f32 %v1086, 9.0
        %v1135 = vmul.f32 %v1087, 9.0
        %v1136 = vmul.f32 %v1088, 9.0
        %v1137 = vmul.f32 %v1089, 9.0
        %v1138 = vmul.f32 %v1090, 9.0
        %v1139 = vsub.f32 %v1131, %v1091
        %v1140 = vsub.f32 %v1132, %v1092
        %v1141 = vsub.f32 %v1133, %v1093
        %v1142 = vsub.f32 %v1134, %v1094
        %v1143 = vsub.f32 %v1135, %v1095
        %v1144 = vsub.f32 %v1136, %v1096
        %v1145 = vsub.f32 %v1137, %v1097
        %v1146 = vsub.f32 %v1138, %v1098
        %v1147 = vmul.f32 %v1139, 2.0
        %v1148 = vmul.f32 %v1140, 2.0
        %v1149 = vmul.f32 %v1141, 2.0
        %v1150 = vmul.f32 %v1142, 2.0
        %v1151 = vmul.f32 %v1143, 2.0
        %v1152 = vmul.f32 %v1144, 2.0
        %v1153 = vmul.f32 %v1145, 2.0
        %v1154 = vmul.f32 %v1146, 2.0
        %v1155 = vadd.f32 %v1147, 0.0729
        %v1156 = vadd.f32 %v1148, 0.0729
        %v1157 = vadd.f32 %v1149, 0.0729
        %v1158 = vadd.f32 %v1150, 0.0729
        %v1159 = vadd.f32 %v1151, 0.0729
        %v1160 = vadd.f32 %v1152, 0.0729
        %v1161 = vadd.f32 %v1153, 0.0729
        %v1162 = vadd.f32 %v1154, 0.0729
        %v1163 = vmul.f32 %v1123, %v1155
        %v1164 = vmul.f32 %v1124, %v1156
        %v1165 = vmul.f32 %v1125, %v1157
        %v1166 = vmul.f32 %v1126, %v1158
        %v1167 = vmul.f32 %v1127, %v1159
        %v1168 = vmul.f32 %v1128, %v1160
        %v1169 = vmul.f32 %v1129, %v1161
        %v1170 = vmul.f32 %v1130, %v1162
        %v1171 = vadd.f32 %v1099, %v1107
        %v1172 = vadd.f32 %v1100, %v1108
        %v1173 = vadd.f32 %v1101, %v1109
        %v1174 = vadd.f32 %v1102, %v1110
        %v1175 = vadd.f32 %v1103, %v1111
        %v1176 = vadd.f32 %v1104, %v1112
        %v1177 = vadd.f32 %v1105, %v1113
        %v1178 = vadd.f32 %v1106, %v1114
        %v1179 = vadd.f32 %v1171, 0.0081
        %v1180 = vadd.f32 %v1172, 0.0081
        %v1181 = vadd.f32 %v1173, 0.0081
        %v1182 = vadd.f32 %v1174, 0.0081
        %v1183 = vadd.f32 %v1175, 0.0081
        %v1184 = vadd.f32 %v1176, 0.0081
        %v1185 = vadd.f32 %v1177, 0.0081
        %v1186 = vadd.f32 %v1178, 0.0081
        %v1187 = vadd.f32 %v731, %v907
        %v1188 = vadd.f32 %v732, %v908
        %v1189 = vadd.f32 %v733, %v909
        %v1190 = vadd.f32 %v734, %v910
        %v1191 = vadd.f32 %v735, %v911
        %v1192 = vadd.f32 %v736, %v912
        %v1193 = vadd.f32 %v737, %v913
        %v1194 = vadd.f32 %v738, %v914
        %v1195 = vmul.f32 %v1187, 9.0
        %v1196 = vmul.f32 %v1188, 9.0
        %v1197 = vmul.f32 %v1189, 9.0
        %v1198 = vmul.f32 %v1190, 9.0
        %v1199 = vmul.f32 %v1191, 9.0
        %v1200 = vmul.f32 %v1192, 9.0
        %v1201 = vmul.f32 %v1193, 9.0
        %v1202 = vmul.f32 %v1194, 9.0
        %v1203 = vsub.f32 %v1195, %v1099
        %v1204 = vsub.f32 %v1196, %v1100
        %v1205 = vsub.f32 %v1197, %v1101
        %v1206 = vsub.f32 %v1198, %v1102
        %v1207 = vsub.f32 %v1199, %v1103
        %v1208 = vsub.f32 %v1200, %v1104
        %v1209 = vsub.f32 %v1201, %v1105
        %v1210 = vsub.f32 %v1202, %v1106
        %v1211 = vsub.f32 %v1203, %v1107
        %v1212 = vsub.f32 %v1204, %v1108
        %v1213 = vsub.f32 %v1205, %v1109
        %v1214 = vsub.f32 %v1206, %v1110
        %v1215 = vsub.f32 %v1207, %v1111
        %v1216 = vsub.f32 %v1208, %v1112
        %v1217 = vsub.f32 %v1209, %v1113
        %v1218 = vsub.f32 %v1210, %v1114
        %v1219 = vadd.f32 %v1211, 0.0729
        %v1220 = vadd.f32 %v1212, 0.0729
        %v1221 = vadd.f32 %v1213, 0.0729
        %v1222 = vadd.f32 %v1214, 0.0729
        %v1223 = vadd.f32 %v1215, 0.0729
        %v1224 = vadd.f32 %v1216, 0.0729
        %v1225 = vadd.f32 %v1217, 0.0729
        %v1226 = vadd.f32 %v1218, 0.0729
        %v1227 = vmul.f32 %v1179, %v1219
        %v1228 = vmul.f32 %v1180, %v1220
        %v1229 = vmul.f32 %v1181, %v1221
        %v1230 = vmul.f32 %v1182, %v1222
        %v1231 = vmul.f32 %v1183, %v1223
        %v1232 = vmul.f32 %v1184, %v1224
        %v1233 = vmul.f32 %v1185, %v1225
        %v1234 = vmul.f32 %v1186, %v1226
        %v1235 = vrcp.pop %v1227
        %v1236 = vmul.f32 %v1163, %v1235
        %v1237 = vrcp.pop %v1228
        %v1238 = vmul.f32 %v1164, %v1237
        %v1239 = vrcp.pop %v1229
        %v1240 = vmul.f32 %v1165, %v1239
        %v1241 = vrcp.pop %v1230
        %v1242 = vmul.f32 %v1166, %v1241
        %v1243 = vrcp.pop %v1231
        %v1244 = vmul.f32 %v1167, %v1243
        %v1245 = vrcp.pop %v1232
        %v1246 = vmul.f32 %v1168, %v1245
        %v1247 = vrcp.pop %v1233
        %v1248 = vmul.f32 %v1169, %v1247
        %v1249 = vrcp.pop %v1234
        %v1250 = vmul.f32 %v1170, %v1249
        %v1251 = vsub.f32 1.0, %v1236
        %v1252 = vsub.f32 1.0, %v1238
        %v1253 = vsub.f32 1.0, %v1240
        %v1254 = vsub.f32 1.0, %v1242
        %v1255 = vsub.f32 1.0, %v1244
        %v1256 = vsub.f32 1.0, %v1246
        %v1257 = vsub.f32 1.0, %v1248
        %v1258 = vsub.f32 1.0, %v1250
        %v1259 = vmul.f32 %v1251, 0.5
        %v1260 = vmul.f32 %v1252, 0.5
        %v1261 = vmul.f32 %v1253, 0.5
        %v1262 = vmul.f32 %v1254, 0.5
        %v1263 = vmul.f32 %v1255, 0.5
        %v1264 = vmul.f32 %v1256, 0.5
        %v1265 = vmul.f32 %v1257, 0.5
        %v1266 = vmul.f32 %v1258, 0.5
        %v1267 = vmax.f32 %v1259, 0.0
        %v1268 = vmax.f32 %v1260, 0.0
        %v1269 = vmax.f32 %v1261, 0.0
        %v1270 = vmax.f32 %v1262, 0.0
        %v1271 = vmax.f32 %v1263, 0.0
        %v1272 = vmax.f32 %v1264, 0.0
        %v1273 = vmax.f32 %v1265, 0.0
        %v1274 = vmax.f32 %v1266, 0.0
        %v1275 = vmin.f32 %v1267, 1.0
        %v1276 = vmin.f32 %v1268, 1.0
        %v1277 = vmin.f32 %v1269, 1.0
        %v1278 = vmin.f32 %v1270, 1.0
        %v1279 = vmin.f32 %v1271, 1.0
        %v1280 = vmin.f32 %v1272, 1.0
        %v1281 = vmin.f32 %v1273, 1.0
        %v1282 = vmin.f32 %v1274, 1.0
        %vm1283 = vcmask 130048
        %1284 = vst.msk [vmem:[%s203] sm:$0xff] %vm1283, %v1275
        %1285 = vst.msk [vmem:[%s203 + $0x8] sm:$0xff] %vm1283, %v1276
        %1286 = vst.msk [vmem:[%s203 + $0x10] sm:$0xff] %vm1283, %v1277
        %1287 = vst.msk [vmem:[%s203 + $0x18] sm:$0xff] %vm1283, %v1278
        %1288 = vst.msk [vmem:[%s203 + $0x20] sm:$0xff] %vm1283, %v1279
        %1289 = vst.msk [vmem:[%s203 + $0x28] sm:$0xff] %vm1283, %v1280
        %1290 = vst.msk [vmem:[%s203 + $0x30] sm:$0xff] %vm1283, %v1281
        %1291 = vst.msk [vmem:[%s203 + $0x38] sm:$0xff] %vm1283, %v1282
        %s1292 = sand.u32 %s82, 1
        %s1293 = scalar_lea.sflag [#allocation4], %s1292
        %s1294 = sand.u32 %s82, 1
        %s1295 = smul.addr %s1294, 64
        %s1296 = scalar_lea.vmem [#allocation7], %s1295
        // Predicated region
        $region37: #{tpu_custom_call.1} parent=27 // pred_check
          %p1297 = pneg %p92
        $region38: #{tpu_custom_call.1} parent=27 // pred_check_branch
          %1299 = sbr.rel (%p1297) target = $region40
        $region39: #{tpu_custom_call.1} parent=27 // pred_region
          %s1300 = smul.u32 4, %s22
          %s1302 = ssub.s32 1024, 1024
          %1303 = vsyncadd %s1293, %s1302
          %s1304 = smul.addr %s1300, 2
          %s1305 = smul.addr %s1304, 128
          %s1306 = scalar_lea.hbm %s2, %s1305
          %s1307 = sshll.u32 %s1296, 4
          %s1308 = int_to_ptr.vmem [resolvable:$true] %s1307
          %1313 = dma.vmem_to_hbm [thread:$0]  %s1308, 1024, %s1306, %s1293, 128, 128, 8
        $region40: #{tpu_custom_call.1} parent=27 // pred_fallthru
          _
      $region28: #{tpu_custom_call.1} parent=5 // pred_fallthru
        _
      %p1314 = scmp.le.s32.totalorder 2, %s17
      // Predicated region
      $region41: #{tpu_custom_call.1} parent=5 // pred_check
        %p1315 = pneg %p1314
      $region42: #{tpu_custom_call.1} parent=5 // pred_check_branch
        %1317 = sbr.rel (%p1315) target = $region44
      $region43: #{tpu_custom_call.1} parent=5 // pred_region
        %s1318 = ssub.s32 %s17, 2
        // Predicated region
        $region45: #{tpu_custom_call.1} parent=43 // pred_check
          %p1319 = pneg %p98
        $region46: #{tpu_custom_call.1} parent=43 // pred_check_branch
          %1321 = sbr.rel (%p1319) target = $region48
        $region47: #{tpu_custom_call.1} parent=43 // pred_region
          %s1322 = sand.u32 %s83, 1
          %s1323 = scalar_lea.sflag [#allocation4], %s1322
          %s1324 = sand.u32 %s83, 1
          %s1325 = smul.addr %s1324, 64
          %s1326 = scalar_lea.vmem [#allocation7], %s1325
          %1327 = dma.done %s1323, 1024
        $region48: #{tpu_custom_call.1} parent=43 // pred_fallthru
          _
      $region44: #{tpu_custom_call.1} parent=5 // pred_fallthru
        _
    $region6: #{tpu_custom_call.1} parent=1 // loop_footer
      %s21 = sadd.s32 1, %s17
    $region7: #{tpu_custom_call.1} parent=1 // loop_footer_branch
      %16 = sbr.rel target = $region3
    $region8: #{tpu_custom_call.1} parent=1 // loop_exit
      _
    %1328 = vsyncpa [#allocation3], 1
    %s1329 = scalar_lea.sflag [#allocation3], 1
    %1330 = vsyncpa %s1329, 1
    %1331 = vsyncpa [#allocation6], 1
    %s1332 = scalar_lea.sflag [#allocation6], 1
    %1333 = vsyncpa %s1332, 1
    %1334 = vsyncpa [#allocation4], 1
    %s1335 = scalar_lea.sflag [#allocation4], 1
    %1336 = vsyncpa %s1335, 1

</llo_original>
